<compile_context>
chip_gen: v7x
topology: tpu7x:2x2x1
jax: 0.10.0
libtpu: 0.0.40
codegen_flags: <defaults>
</compile_context>

<pallas_src>
import functools
import math

import jax
import jax.numpy as jnp
from jax.experimental import pallas as pl
from jax.experimental.pallas import tpu as pltpu


DEFAULT_BLOCK_BUDGET = 4 * 1024 * 1024   # bytes of x per block (per buffer)
VMEM_LIMIT_BYTES = 40 * 1024 * 1024      # safe on v5e / v6e / v7x


def _round_up(v, m):
    return (v + m - 1) // m * m


def _sublane_pack(dtype):
    # Sublanes per packed 32-bit row: f32 -> 8, bf16 -> 16, int8/fp8 -> 32.
    return max(8, 32 // jnp.dtype(dtype).itemsize)


def _scale_mul_kernel(scale_ref, x_ref, o_ref):
    # scale_ref: per-sample f32 scale (0 or 1/keep_prob), broadcasts against
    # the x tile. Multiply in f32, single cast on store.
    o_ref[...] = (x_ref[...] * scale_ref[...]).astype(o_ref.dtype)


def _skip_mul_kernel(keep_ref, x_ref, o_ref, *, inv_keep_prob):
    # keep_ref: (B,) int32 in SMEM (scalar prefetch). One sample per block
    # along grid axis 0; dropped samples never have their x block re-fetched
    # (the index_map aliases them to block (0,0,0)), we just write zeros.
    kept = keep_ref[pl.program_id(0)] > 0
    scale = jnp.where(kept, jnp.float32(inv_keep_prob), jnp.float32(0.0))
    o_ref[...] = (x_ref[...] * scale).astype(o_ref.dtype)


def drop_path_pallas(x, keep_mask, drop_prob, *, donate_x=False,
                     block_budget_bytes=DEFAULT_BLOCK_BUDGET):
    """x: (B, ...); keep_mask: (B,) floats of 0/1; drop_prob in [0, 1)."""
    if not (0.0 <= drop_prob < 1.0):
        raise ValueError(f"drop_prob must be in [0, 1), got {drop_prob}")
    keep_prob = 1.0 - drop_prob
    inv_keep = 1.0 / keep_prob

    B = x.shape[0]
    CF = math.prod(x.shape[1:])
    dtype = x.dtype
    itemsize = jnp.dtype(dtype).itemsize
    pack = _sublane_pack(dtype)

    compiler_params = pltpu.CompilerParams(
        dimension_semantics=("parallel", "parallel"),
        vmem_limit_bytes=VMEM_LIMIT_BYTES,
    )

    # Per-sample scale in f32 (never rounded to x.dtype).
    scale = keep_mask.astype(jnp.float32) * jnp.float32(inv_keep)

    if CF % 128 == 0:
        # ------- lane-dense 3D view (B, R, 128): dense vregs for any B -------
        R = CF // 128
        x3 = x.reshape(B, R, 128)
        per_sample_rows = _round_up(R, pack)
        per_sample_bytes = per_sample_rows * 128 * itemsize

        if per_sample_bytes >= block_budget_bytes:
            # --- one sample per batch-block: dropped-sample DMA skip ---
            ts = max(pack, (block_budget_bytes // (128 * itemsize)) // pack * pack)
            ts = min(ts, per_sample_rows)
            grid = (B, pl.cdiv(R, ts))

            def x_map(i, j, keep_ref):
                kept = keep_ref[i] > 0
                # Dropped samples alias block (0, 0, 0); with j innermost,
                # consecutive identical block indices dedup the input DMA.
                return (jnp.where(kept, i, 0), jnp.where(kept, j, 0), 0)

            out3 = pl.pallas_call(
                functools.partial(_skip_mul_kernel, inv_keep_prob=inv_keep),
                out_shape=jax.ShapeDtypeStruct((B, R, 128), dtype),
                grid_spec=pltpu.PrefetchScalarGridSpec(
                    num_scalar_prefetch=1,
                    grid=grid,
                    in_specs=[pl.BlockSpec((1, ts, 128), x_map)],
                    out_specs=pl.BlockSpec((1, ts, 128),
                                           lambda i, j, keep_ref: (i, j, 0)),
                ),
                compiler_params=compiler_params,
            )(keep_mask.astype(jnp.int32), x3)
            return out3.reshape(x.shape)

        # --- several samples per block: (TBB, TS, 128) tiles ---
        ts = per_sample_rows
        tbb = min(B, 512, max(1, block_budget_bytes // (ts * 128 * itemsize)))
        grid = (pl.cdiv(B, tbb), pl.cdiv(R, ts))
        scale3 = scale.reshape(B, 1, 1)

        out3 = pl.pallas_call(
            _scale_mul_kernel,
            out_shape=jax.ShapeDtypeStruct((B, R, 128), dtype),
            grid=grid,
            in_specs=[
                pl.BlockSpec((tbb, 1, 1), lambda i, j: (i, 0, 0)),      # scale
                pl.BlockSpec((tbb, ts, 128), lambda i, j: (i, j, 0)),   # x
            ],
            out_specs=pl.BlockSpec((tbb, ts, 128), lambda i, j: (i, j, 0)),
            compiler_params=compiler_params,
            input_output_aliases=({1: 0} if donate_x else {}),
        )(scale3, x3)
        return out3.reshape(x.shape)

    # ------- ragged feature dim: 2D (B, CF), ceil-div grid, masked edges -------
    x2 = x.reshape(B, CF)
    lane_budget = max(128, (block_budget_bytes // (pack * itemsize)) // 128 * 128)
    tn = min(_round_up(CF, 128), lane_budget)
    tb = max(pack, (block_budget_bytes // (tn * itemsize)) // pack * pack)
    tb = min(tb, _round_up(B, pack), 4096)
    grid = (pl.cdiv(B, tb), pl.cdiv(CF, tn))
    scale2 = scale.reshape(B, 1)

    out2 = pl.pallas_call(
        _scale_mul_kernel,
        out_shape=jax.ShapeDtypeStruct((B, CF), dtype),
        grid=grid,
        in_specs=[
            pl.BlockSpec((tb, 1), lambda i, j: (i, 0)),    # scale
            pl.BlockSpec((tb, tn), lambda i, j: (i, j)),   # x
        ],
        out_specs=pl.BlockSpec((tb, tn), lambda i, j: (i, j)),
        compiler_params=compiler_params,
        input_output_aliases=({1: 0} if donate_x else {}),
    )(scale2, x2)
    return out2.reshape(x.shape)


def drop_path(x, drop_prob=0.0, training=False, *, rng_key=None):
    """Full DropPath forward (identity fast-path handled in plain JAX)."""
    if drop_prob == 0.0 or not training:
        return x
    if rng_key is None:
        raise ValueError("rng_key is required when training with drop_prob > 0")
    keep_prob = 1.0 - drop_prob
    B = x.shape[0]
    # random_tensor = floor(keep_prob + U[0,1))  ==  Bernoulli(keep_prob)
    u = jax.random.uniform(rng_key, (B,), dtype=jnp.float32)
    keep_mask = jnp.floor(keep_prob + u)          # 0.0 or 1.0 per sample
    return drop_path_pallas(x, keep_mask, drop_prob)


class DropPath:
    def __init__(self, drop_prob=None):
        self.drop_prob = drop_prob
        self.training = True

    def __call__(self, x, rng_key=None):
        return drop_path(x, self.drop_prob or 0.0, self.training, rng_key=rng_key)


if __name__ == "__main__":
    key = jax.random.PRNGKey(0)
    kx, kmask, kx8, kmask8, kxr, kxs = jax.random.split(key, 6)

    drop_prob = 0.25
    keep_prob = 1.0 - drop_prob
    module = DropPath(drop_prob)

    # --- case 1: spec shape (2,4,16,16) f32 -> batched (B, R, 128) path ---
    x = jax.random.normal(kx, (2, 4, 16, 16), dtype=jnp.float32)
    y = jax.block_until_ready(module(x, rng_key=kmask))
    u = jax.random.uniform(kmask, (2,), dtype=jnp.float32)
    m = jnp.floor(keep_prob + u).reshape(2, 1, 1, 1)
    y_ref = x / keep_prob * m
    assert jnp.allclose(y, y_ref, rtol=1e-5, atol=1e-6), "mismatch (f32, B=2)"

    # --- case 2: bf16, B=8 -> dtype-aware sublane tiling, f32-scale precision ---
    x8 = jax.random.normal(kx8, (8, 4, 16, 16), dtype=jnp.float32).astype(jnp.bfloat16)
    y8 = jax.block_until_ready(module(x8, rng_key=kmask8))
    u8 = jax.random.uniform(kmask8, (8,), dtype=jnp.float32)
    m8 = jnp.floor(keep_prob + u8).reshape(8, 1, 1, 1)
    y8_ref = x8.astype(jnp.float32) / keep_prob * m8
    assert jnp.allclose(y8.astype(jnp.float32), y8_ref, rtol=1e-2, atol=1e-2), \
        "mismatch (bf16, B=8)"

    # --- case 3: ragged C*H*W (105, not a multiple of 128) -> masked-edge path ---
    xr = jax.random.normal(kxr, (2, 3, 5, 7), dtype=jnp.float32)
    km_r = jnp.array([1.0, 0.0], dtype=jnp.float32)
    yr = jax.block_until_ready(drop_path_pallas(xr, km_r, drop_prob))
    yr_ref = xr / keep_prob * km_r.reshape(2, 1, 1, 1)
    assert jnp.allclose(yr, yr_ref, rtol=1e-5, atol=1e-6), "mismatch (ragged CF)"

    # --- case 4: dropped-sample DMA-skip path (forced via tiny block budget) ---
    xs = jax.random.normal(kxs, (4, 8, 32, 32), dtype=jnp.float32)
    km_s = jnp.array([1.0, 0.0, 1.0, 0.0], dtype=jnp.float32)
    ys = jax.block_until_ready(
        drop_path_pallas(xs, km_s, drop_prob, block_budget_bytes=16 * 1024))
    ys_ref = xs / keep_prob * km_s.reshape(4, 1, 1, 1)
    assert jnp.allclose(ys, ys_ref, rtol=1e-5, atol=1e-6), "mismatch (skip path)"

    # --- eval path: identity, no kernel ---
    module.training = False
    y_eval = jax.block_until_ready(module(x, rng_key=kmask))
    assert jnp.array_equal(y_eval, x)

    print("KERNEL_OK")
</pallas_src>

<mosaic_0001>
module attributes {stable_mosaic.version = 11 : i64} {
  func.func @_scale_mul_kernel(%arg0: i32, %arg1: i32, %arg2: memref<2x1x1xf32, #tpu.memory_space<vmem>>, %arg3: memref<2x8x128xf32, #tpu.memory_space<vmem>>, %arg4: memref<2x8x128xf32, #tpu.memory_space<vmem>>) attributes {dimension_semantics = [#tpu.dimension_semantics<parallel>, #tpu.dimension_semantics<parallel>], iteration_bounds = array<i64: 1, 1>, scalar_prefetch = 0 : i64, scratch_operands = 0 : i64, tpu.core_type = #tpu.core_type<tc>, window_params = [{transform_indices = @transform_0, window_bounds = array<i64: 2, 1, 1>}, {transform_indices = @transform_1, window_bounds = array<i64: 2, 8, 128>}, {transform_indices = @transform_2, window_bounds = array<i64: 2, 8, 128>}]} {
    %c0 = arith.constant 0 : index
    %c0_0 = arith.constant 0 : index
    %c0_1 = arith.constant 0 : index
    %0 = vector.load %arg3[%c0, %c0_0, %c0_1] : memref<2x8x128xf32, #tpu.memory_space<vmem>>, vector<2x8x128xf32>
    %c0_2 = arith.constant 0 : index
    %c0_3 = arith.constant 0 : index
    %c0_4 = arith.constant 0 : index
    %1 = vector.load %arg2[%c0_2, %c0_3, %c0_4] : memref<2x1x1xf32, #tpu.memory_space<vmem>>, vector<2x1x1xf32>
    %2 = vector.broadcast %1 : vector<2x1x1xf32> to vector<2x8x128xf32>
    %3 = arith.mulf %0, %2 : vector<2x8x128xf32>
    %c0_5 = arith.constant 0 : index
    %c0_6 = arith.constant 0 : index
    %c0_7 = arith.constant 0 : index
    %4 = vector.load %arg4[%c0_5, %c0_6, %c0_7] : memref<2x8x128xf32, #tpu.memory_space<vmem>>, vector<2x8x128xf32>
    tpu.vector_store %arg4[%c0_5, %c0_6, %c0_7], %3 {strides = array<i32>} : memref<2x8x128xf32, #tpu.memory_space<vmem>>, vector<2x8x128xf32>,
    return
  }
  func.func @transform_0(%arg0: i32, %arg1: i32) -> (i32, i32, i32) {
    %c0_i32 = arith.constant 0 : i32
    %c0_i32_0 = arith.constant 0 : i32
    %c0_i32_1 = arith.constant 0 : i32
    return %arg0, %c0_i32, %c0_i32_0 : i32, i32, i32
  }
  func.func @transform_1(%arg0: i32, %arg1: i32) -> (i32, i32, i32) {
    %c0_i32 = arith.constant 0 : i32
    %c0_i32_0 = arith.constant 0 : i32
    return %arg0, %arg1, %c0_i32 : i32, i32, i32
  }
  func.func @transform_2(%arg0: i32, %arg1: i32) -> (i32, i32, i32) {
    %c0_i32 = arith.constant 0 : i32
    %c0_i32_0 = arith.constant 0 : i32
    return %arg0, %arg1, %c0_i32 : i32, i32, i32
  }
}

</mosaic_0001>

<llo_original>
// kernel: tpu_custom_call.1
$region0: #{tpu_custom_call.1}
  #allocation0 [shape = 'u32[]', space=smem, size = 0x4, offset = 0x4, fixed_abs, tag = 'smem constant byte address 0x4 - core index']
  #allocation1 [shape = 'u32[144,128]{1,0:T(1,128)}', space=vmem, size = 0x12000, scoped, tag = 'internal scratch']
  %s0 = inlined_call_operand.vmem [shape: f32[2,1,1], index: 0, kind: input, shape index: {}]
  %s1 = inlined_call_operand.hbm [shape: f32[2,8,128], index: 1, kind: input, shape index: {}]
  %s2 = inlined_call_operand.hbm [shape: f32[2,8,128], index: 2, kind: output, shape index: {}]
  %s3 = sld [smem:[#allocation0]]
  $region22: #{tpu_custom_call.1} parent=0
    _
  %s5 = ssub.s32 1, %s3
  %s6 = scalar_select 0, %s5, %s3
  $region1: #{tpu_custom_call.1} parent=0
    #allocation2 [shape = 'u8[8192]{0}', space=vmem, size = 0x2000, scoped, tag = 'input window, operand 1, single buffered']
    #allocation3 [shape = 's32[1]{0}', space=sflag, size = 0x4, scoped, tag = 'scoped memory for tpu_custom_call.1']
    #allocation4 [shape = 's32[1]{0}', space=sflag, size = 0x4, scoped, tag = 'scoped memory for tpu_custom_call.1']
    #allocation5 [shape = 'u8[8192]{0}', space=vmem, size = 0x2000, scoped, tag = 'output window, operand 0, single buffered']
    %7 = vsyncpa [#allocation3], 0
    %8 = vsyncpa [#allocation4], 0
    // Predicated region
    $region2: #{tpu_custom_call.1} parent=1 // pred_check
      _
    $region3: #{tpu_custom_call.1} parent=1 // pred_check_branch
      %10 = sbr.rel (0) target = $region5
    $region4: #{tpu_custom_call.1} parent=1 // pred_region
      _
    $region5: #{tpu_custom_call.1} parent=1 // pred_fallthru
      _
    // Predicated region
    $region6: #{tpu_custom_call.1} parent=1 // pred_check
      _
    $region7: #{tpu_custom_call.1} parent=1 // pred_check_branch
      %12 = sbr.rel (0) target = $region9
    $region8: #{tpu_custom_call.1} parent=1 // pred_region
      %s14 = ssub.s32 256, 256
      %15 = vsyncadd [#allocation3], %s14
      %s16 = sshll.u32 [#allocation2], 4
      %s17 = int_to_ptr.vmem [resolvable:$true] %s16
      %22 = dma.hbm_to_vmem [thread:$0]  %s1, 256, %s17, [#allocation3], 128, 128, 8
    $region9: #{tpu_custom_call.1} parent=1 // pred_fallthru
      _
    // Predicated region
    $region10: #{tpu_custom_call.1} parent=1 // pred_check
      _
    $region11: #{tpu_custom_call.1} parent=1 // pred_check_branch
      %24 = sbr.rel (0) target = $region13
    $region12: #{tpu_custom_call.1} parent=1 // pred_region
      %25 = dma.done [#allocation3], 256
    $region13: #{tpu_custom_call.1} parent=1 // pred_fallthru
      _
    %v26 = vld [vmem:[#allocation2] sm:$0xff]
    %v27 = vld [vmem:[#allocation2 + $0x8] sm:$0xff]
    %v28 = vld [vmem:[%s0] sm:$0x1]
    %v29 = vld [vmem:[%s0 + $0x1] sm:$0x1]
    %v32 = vlaneseq
    %v33 = vshrl.u32 %v32, 7
    %v34 = vsub.s32 0, %v33
    %v35 = vrot.slane %v28, %v34
    %v36 = vlaneseq
    %v37 = vshrl.u32 %v36, 7
    %v38 = vsub.s32 0, %v37
    %v39 = vrot.slane %v29, %v38
    %40 = vset.pattern.permute.xlu0 0
    %41 = vperm.xlu0 %40, %v35
    %v42 = vpop.permute.xlu0 %41
    %44 = vset.pattern.permute.xlu0 0
    %45 = vperm.xlu0 %44, %v39
    %v46 = vpop.permute.xlu0 %45
    %v48 = vmul.f32 %v26, %v42
    %v49 = vmul.f32 %v27, %v46
    %50 = vst [vmem:[#allocation5] sm:$0xff] %v48
    %51 = vst [vmem:[#allocation5 + $0x8] sm:$0xff] %v49
    // Predicated region
    $region14: #{tpu_custom_call.1} parent=1 // pred_check
      _
    $region15: #{tpu_custom_call.1} parent=1 // pred_check_branch
      %53 = sbr.rel (0) target = $region17
    $region16: #{tpu_custom_call.1} parent=1 // pred_region
      %s55 = ssub.s32 256, 256
      %56 = vsyncadd [#allocation4], %s55
      %s57 = sshll.u32 [#allocation5], 4
      %s58 = int_to_ptr.vmem [resolvable:$true] %s57
      %63 = dma.vmem_to_hbm [thread:$0]  %s58, 256, %s2, [#allocation4], 128, 128, 8
    $region17: #{tpu_custom_call.1} parent=1 // pred_fallthru
      _
    // Predicated region
    $region18: #{tpu_custom_call.1} parent=1 // pred_check
      _
    $region19: #{tpu_custom_call.1} parent=1 // pred_check_branch
      %65 = sbr.rel (0) target = $region21
    $region20: #{tpu_custom_call.1} parent=1 // pred_region
      %66 = dma.done [#allocation4], 256
    $region21: #{tpu_custom_call.1} parent=1 // pred_fallthru
      _
    %67 = vsyncpa [#allocation3], 1
    %68 = vsyncpa [#allocation4], 1

</llo_original>
